<compile_context>
chip_gen: v7x
topology: tpu7x:2x2x1
jax: 0.10.0
libtpu: 0.0.40
codegen_flags: <defaults>
</compile_context>

<pallas_src>
import functools

import jax
import jax.numpy as jnp
from jax import lax
from jax.experimental import pallas as pl
from jax.experimental.pallas import tpu as pltpu

BN_EPS = 1e-5
NEG_SLOPE = 0.2


def _conv_stats_kernel(w_ref, p_ref, y_ref, sum_ref, sq_ref):
    """Pass 1: conv tile on the MXU, cache y (bf16), accumulate per-core BN partials."""
    @pl.when(pl.program_id(1) == 0)
    def _():
        sum_ref[...] = jnp.zeros_like(sum_ref)
        sq_ref[...] = jnp.zeros_like(sq_ref)

    # [Cout, K] bf16 @ [K, TM] bf16 -> [Cout, TM] with f32 accumulation on the MXU.
    y = jnp.dot(w_ref[...], p_ref[...], preferred_element_type=jnp.float32)
    y_ref[...] = y.astype(y_ref.dtype)                      # lane-dense bf16 cache of y
    sum_ref[...] += jnp.sum(y, axis=1, keepdims=True)[None]  # (1, Cout, 1) per-core partial
    sq_ref[...] += jnp.sum(y * y, axis=1, keepdims=True)[None]


def _bn_act_kernel(y_ref, scale_ref, shift_ref, o_ref):
    """Pass 2: folded BN (scale*y + shift) + LeakyReLU(0.2) on the cached conv output."""
    z = scale_ref[...] * y_ref[...].astype(jnp.float32) + shift_ref[...]
    o_ref[...] = jnp.where(z >= 0, z, NEG_SLOPE * z)


def _im2col_t(x, kd, kh, kw, stride):
    """x: [N, Cin, D, H, W] -> transposed patches [K, M].

    K ordering = Cin-major then (kd, kh, kw), matching weight.reshape(Cout, Cin*kd*kh*kw).
    M ordering = row-major over (N, Do, Ho, Wo).
    """
    N, C, D, H, W = x.shape
    Do = (D - kd) // stride + 1
    Ho = (H - kh) // stride + 1
    Wo = (W - kw) // stride + 1
    cols = []
    for i in range(kd):
        for j in range(kh):
            for l in range(kw):
                cols.append(
                    x[:, :,
                      i:i + (Do - 1) * stride + 1:stride,
                      j:j + (Ho - 1) * stride + 1:stride,
                      l:l + (Wo - 1) * stride + 1:stride])
    p = jnp.stack(cols, axis=2)                                  # [N, Cin, T, Do, Ho, Wo]
    p = p.transpose(1, 2, 0, 3, 4, 5)                            # [Cin, T, N, Do, Ho, Wo]
    p = p.reshape(C * kd * kh * kw, N * Do * Ho * Wo)            # [K, M]
    return p, (Do, Ho, Wo)


def _round_up(a, b):
    return (a + b - 1) // b * b


def _pick_tm(M, K_pad, Cout):
    """Largest lane tile (multiple of 128, <= 8192) whose double-buffered streams fit a
    conservative VMEM budget that works on v5e/v6e/v7x scoped defaults."""
    budget = 12 << 20                                   # < v5e's 16 MiB scoped default
    per_col_p1 = 2 * (K_pad + Cout) * 2                 # bf16 patches + bf16 y, double-buffered
    per_col_p2 = 2 * Cout * (2 + 4)                     # bf16 y in + f32 out, double-buffered
    per_col = max(per_col_p1, per_col_p2)
    tm = (budget // per_col) // 128 * 128
    tm = max(128, min(8192, tm))
    return min(tm, _round_up(M, 128))


@functools.partial(jax.jit, static_argnames=("stride",))
def conv3d_block(x, weight, bias, gamma, beta, *, stride):
    """Conv3d(valid, stride) + BatchNorm3d(training batch stats) + LeakyReLU(0.2).

    x:      [N, Cin, D, H, W]   (NCDHW, like PyTorch)
    weight: [Cout, Cin, kd, kh, kw]
    returns [N, Cout, Do, Ho, Wo] (f32)
    """
    del bias  # cancelled exactly by the training-mode BN mean subtraction
    N, Cin, D, H, W = x.shape
    Cout, _, kd, kh, kw = weight.shape

    # TODO(synk): replace this HBM im2col with an in-kernel tap-sum over halo'd x tiles.
    patches_t, (Do, Ho, Wo) = _im2col_t(x.astype(jnp.bfloat16), kd, kh, kw, stride)
    K, M = patches_t.shape

    K_pad = _round_up(K, 16)                 # bf16 sublane packing
    TM = _pick_tm(M, K_pad, Cout)            # lane-dense M tile, VMEM-budgeted
    n_tiles = -(-M // TM)
    n_half = -(-n_tiles // 2)                # pass-1 work per TensorCore (v7x 2-TC split)
    n_tiles_p = 2 * n_half
    M_pad = n_tiles_p * TM

    # Zero-padded M columns give y == 0 -> contribute nothing to the sums; divide by true M.
    patches_t = jnp.pad(patches_t, ((0, K_pad - K), (0, M_pad - M)))
    w_mat = jnp.pad(weight.reshape(Cout, K).astype(jnp.bfloat16), ((0, 0), (0, K_pad - K)))

    # ---- Pass 1: conv matmul (read patches once), cache y, per-core partial BN stats. ----
    y_t, psum, psq = pl.pallas_call(
        _conv_stats_kernel,
        out_shape=(jax.ShapeDtypeStruct((Cout, M_pad), jnp.bfloat16),
                   jax.ShapeDtypeStruct((2, Cout, 1), jnp.float32),
                   jax.ShapeDtypeStruct((2, Cout, 1), jnp.float32)),
        grid=(2, n_half),
        in_specs=[
            pl.BlockSpec((Cout, K_pad), lambda c, t: (0, 0)),                 # resident weight
            pl.BlockSpec((K_pad, TM), lambda c, t: (0, c * n_half + t)),      # streamed patches
        ],
        out_specs=(
            pl.BlockSpec((Cout, TM), lambda c, t: (0, c * n_half + t)),       # cached y (bf16)
            pl.BlockSpec((1, Cout, 1), lambda c, t: (c, 0, 0)),               # per-core sum
            pl.BlockSpec((1, Cout, 1), lambda c, t: (c, 0, 0)),               # per-core sum sq
        ),
        compiler_params=pltpu.CompilerParams(
            dimension_semantics=("parallel", "arbitrary")),
    )(w_mat, patches_t)

    # Fold BN into one per-channel FMA: z = scale*y + shift (biased variance, like PyTorch).
    count = jnp.float32(M)
    ssum = jnp.sum(psum, axis=0)             # reduce the two per-core partials
    ssq = jnp.sum(psq, axis=0)
    mean = ssum / count
    var = jnp.maximum(ssq / count - mean * mean, 0.0)
    scale = gamma.reshape(Cout, 1) * lax.rsqrt(var + BN_EPS)
    shift = beta.reshape(Cout, 1) - mean * scale

    # ---- Pass 2: elementwise folded-BN + LeakyReLU on the cached y (no matmul, no patches). ----
    out_t = pl.pallas_call(
        _bn_act_kernel,
        out_shape=jax.ShapeDtypeStruct((Cout, M_pad), jnp.float32),
        grid=(n_tiles_p,),
        in_specs=[
            pl.BlockSpec((Cout, TM), lambda t: (0, t)),
            pl.BlockSpec((Cout, 1), lambda t: (0, 0)),
            pl.BlockSpec((Cout, 1), lambda t: (0, 0)),
        ],
        out_specs=pl.BlockSpec((Cout, TM), lambda t: (0, t)),
        compiler_params=pltpu.CompilerParams(dimension_semantics=("parallel",)),
    )(y_t, scale, shift)

    # [Cout, M] -> [N, Cout, Do, Ho, Wo]
    out = out_t[:, :M].reshape(Cout, N, Do, Ho, Wo).transpose(1, 0, 2, 3, 4)
    return out


def _reference(x, weight, bias, gamma, beta, stride):
    """Pure-JAX f32 reference (lax conv + training-mode BN + leaky relu), bias included."""
    y = lax.conv_general_dilated(
        x, weight, window_strides=(stride, stride, stride), padding="VALID",
        dimension_numbers=("NCDHW", "OIDHW", "NCDHW"))
    y = y + bias[None, :, None, None, None]
    mean = jnp.mean(y, axis=(0, 2, 3, 4), keepdims=True)
    var = jnp.mean((y - mean) ** 2, axis=(0, 2, 3, 4), keepdims=True)
    y_hat = (y - mean) * lax.rsqrt(var + BN_EPS)
    z = gamma[None, :, None, None, None] * y_hat + beta[None, :, None, None, None]
    return jnp.where(z >= 0, z, NEG_SLOPE * z)


if __name__ == "__main__":
    # Shapes consistent with Conv3dBlock(in_channels=4, out_channels=8, kernelsz=3, stride=2)
    N, Cin, Cout = 2, 4, 8
    D = H = W = 10
    kd = kh = kw = 3
    stride = 2

    key = jax.random.PRNGKey(0)
    kx, kw_, kb = jax.random.split(key, 3)

    x = jax.random.normal(kx, (N, Cin, D, H, W), dtype=jnp.float32)

    fan_in = Cin * kd * kh * kw
    w_scale = 1.0 / jnp.sqrt(jnp.float32(fan_in))
    weight = jax.random.uniform(kw_, (Cout, Cin, kd, kh, kw), jnp.float32,
                                minval=-w_scale, maxval=w_scale)
    bias = jax.random.uniform(kb, (Cout,), jnp.float32, minval=-w_scale, maxval=w_scale)
    gamma = jnp.ones((Cout,), jnp.float32)    # BatchNorm3d default weight
    beta = jnp.zeros((Cout,), jnp.float32)    # BatchNorm3d default bias

    out = conv3d_block(x, weight, bias, gamma, beta, stride=stride)
    out = jax.block_until_ready(out)

    ref = jax.block_until_ready(_reference(x, weight, bias, gamma, beta, stride))

    assert out.shape == ref.shape, (out.shape, ref.shape)
    # bf16 matmul stream + bf16-cached y (f32 accumulation/stats) vs an f32 reference.
    assert jnp.allclose(out, ref, atol=3e-2, rtol=3e-2), float(jnp.max(jnp.abs(out - ref)))

    print("KERNEL_OK")
</pallas_src>

<mosaic_0001>
module attributes {stable_mosaic.version = 11 : i64} {
  func.func @_conv_stats_kernel(%arg0: i32, %arg1: i32, %arg2: memref<8x112xbf16, #tpu.memory_space<vmem>>, %arg3: memref<112x128xbf16, #tpu.memory_space<vmem>>, %arg4: memref<8x128xbf16, #tpu.memory_space<vmem>>, %arg5: memref<1x8x1xf32, #tpu.memory_space<vmem>>, %arg6: memref<1x8x1xf32, #tpu.memory_space<vmem>>) attributes {dimension_semantics = [#tpu.dimension_semantics<parallel>, #tpu.dimension_semantics<arbitrary>], iteration_bounds = array<i64: 2, 1>, scalar_prefetch = 0 : i64, scratch_operands = 0 : i64, tpu.core_type = #tpu.core_type<tc>, window_params = [{pipeline_mode = #tpu.pipeline_mode<synchronous>, transform_indices = @transform_0, window_bounds = array<i64: 8, 112>}, {transform_indices = @transform_1, window_bounds = array<i64: 112, 128>}, {transform_indices = @transform_2, window_bounds = array<i64: 8, 128>}, {transform_indices = @transform_3, window_bounds = array<i64: 1, 8, 1>}, {transform_indices = @transform_4, window_bounds = array<i64: 1, 8, 1>}]} {
    %c0_i32 = arith.constant 0 : i32
    %0 = arith.cmpi eq, %arg1, %c0_i32 : i32
    %1 = arith.extui %0 : i1 to i32
    %c0_i32_0 = arith.constant 0 : i32
    %2 = arith.cmpi ne, %1, %c0_i32_0 : i32
    scf.if %2 {
      %cst_20 = arith.constant 0.000000e+00 : f32
      %21 = vector.broadcast %cst_20 : f32 to vector<1x8x1xf32>
      %c0_21 = arith.constant 0 : index
      %c0_22 = arith.constant 0 : index
      %c0_23 = arith.constant 0 : index
      %22 = vector.load %arg5[%c0_21, %c0_22, %c0_23] : memref<1x8x1xf32, #tpu.memory_space<vmem>>, vector<1x8x1xf32>
      tpu.vector_store %arg5[%c0_21, %c0_22, %c0_23], %21 {strides = array<i32>} : memref<1x8x1xf32, #tpu.memory_space<vmem>>, vector<1x8x1xf32>,
      %cst_24 = arith.constant 0.000000e+00 : f32
      %23 = vector.broadcast %cst_24 : f32 to vector<1x8x1xf32>
      %c0_25 = arith.constant 0 : index
      %c0_26 = arith.constant 0 : index
      %c0_27 = arith.constant 0 : index
      %24 = vector.load %arg6[%c0_25, %c0_26, %c0_27] : memref<1x8x1xf32, #tpu.memory_space<vmem>>, vector<1x8x1xf32>
      tpu.vector_store %arg6[%c0_25, %c0_26, %c0_27], %23 {strides = array<i32>} : memref<1x8x1xf32, #tpu.memory_space<vmem>>, vector<1x8x1xf32>,
    } else {
    }
    %c0 = arith.constant 0 : index
    %c0_1 = arith.constant 0 : index
    %3 = vector.load %arg2[%c0, %c0_1] : memref<8x112xbf16, #tpu.memory_space<vmem>>, vector<8x112xbf16>
    %c0_2 = arith.constant 0 : index
    %c0_3 = arith.constant 0 : index
    %4 = vector.load %arg3[%c0_2, %c0_3] : memref<112x128xbf16, #tpu.memory_space<vmem>>, vector<112x128xbf16>
    %cst = arith.constant dense<0.000000e+00> : vector<8x128xf32>
    %5 = tpu.matmul %3, %4, %cst {dimension_numbers = #tpu.dot_dimension_numbers<[1], [0], [0], [1], [0, 0, 1, 1], [], []>} : vector<8x112xbf16>, vector<112x128xbf16>, vector<8x128xf32> -> vector<8x128xf32>
    %6 = arith.truncf %5 : vector<8x128xf32> to vector<8x128xbf16>
    %c0_4 = arith.constant 0 : index
    %c0_5 = arith.constant 0 : index
    %7 = vector.load %arg4[%c0_4, %c0_5] : memref<8x128xbf16, #tpu.memory_space<vmem>>, vector<8x128xbf16>
    tpu.vector_store %arg4[%c0_4, %c0_5], %6 {strides = array<i32>} : memref<8x128xbf16, #tpu.memory_space<vmem>>, vector<8x128xbf16>,
    %c0_6 = arith.constant 0 : index
    %c0_7 = arith.constant 0 : index
    %c0_8 = arith.constant 0 : index
    %8 = vector.load %arg5[%c0_6, %c0_7, %c0_8] : memref<1x8x1xf32, #tpu.memory_space<vmem>>, vector<1x8x1xf32>
    %cst_9 = arith.constant dense<0.000000e+00> : vector<8xf32>
    %9 = vector.multi_reduction <add>, %5, %cst_9 [1] : vector<8x128xf32> to vector<8xf32>
    %10 = vector.shape_cast %9 : vector<8xf32> to vector<8x1xf32>
    %11 = vector.shape_cast %10 : vector<8x1xf32> to vector<1x8x1xf32>
    %12 = arith.addf %8, %11 : vector<1x8x1xf32>
    %c0_10 = arith.constant 0 : index
    %c0_11 = arith.constant 0 : index
    %c0_12 = arith.constant 0 : index
    %13 = vector.load %arg5[%c0_10, %c0_11, %c0_12] : memref<1x8x1xf32, #tpu.memory_space<vmem>>, vector<1x8x1xf32>
    tpu.vector_store %arg5[%c0_10, %c0_11, %c0_12], %12 {strides = array<i32>} : memref<1x8x1xf32, #tpu.memory_space<vmem>>, vector<1x8x1xf32>,
    %c0_13 = arith.constant 0 : index
    %c0_14 = arith.constant 0 : index
    %c0_15 = arith.constant 0 : index
    %14 = vector.load %arg6[%c0_13, %c0_14, %c0_15] : memref<1x8x1xf32, #tpu.memory_space<vmem>>, vector<1x8x1xf32>
    %15 = arith.mulf %5, %5 : vector<8x128xf32>
    %cst_16 = arith.constant dense<0.000000e+00> : vector<8xf32>
    %16 = vector.multi_reduction <add>, %15, %cst_16 [1] : vector<8x128xf32> to vector<8xf32>
    %17 = vector.shape_cast %16 : vector<8xf32> to vector<8x1xf32>
    %18 = vector.shape_cast %17 : vector<8x1xf32> to vector<1x8x1xf32>
    %19 = arith.addf %14, %18 : vector<1x8x1xf32>
    %c0_17 = arith.constant 0 : index
    %c0_18 = arith.constant 0 : index
    %c0_19 = arith.constant 0 : index
    %20 = vector.load %arg6[%c0_17, %c0_18, %c0_19] : memref<1x8x1xf32, #tpu.memory_space<vmem>>, vector<1x8x1xf32>
    tpu.vector_store %arg6[%c0_17, %c0_18, %c0_19], %19 {strides = array<i32>} : memref<1x8x1xf32, #tpu.memory_space<vmem>>, vector<1x8x1xf32>,
    return
  }
  func.func @transform_0(%arg0: i32, %arg1: i32) -> (i32, i32) {
    %c0_i32 = arith.constant 0 : i32
    %c0_i32_0 = arith.constant 0 : i32
    %c0_i32_1 = arith.constant 0 : i32
    return %c0_i32, %c0_i32_0 : i32, i32
  }
  func.func @transform_1(%arg0: i32, %arg1: i32) -> (i32, i32) {
    %c1_i32 = arith.constant 1 : i32
    %0 = arith.muli %arg0, %c1_i32 : i32
    %1 = arith.addi %0, %arg1 : i32
    %c0_i32 = arith.constant 0 : i32
    %c0_i32_0 = arith.constant 0 : i32
    return %c0_i32, %1 : i32, i32
  }
  func.func @transform_2(%arg0: i32, %arg1: i32) -> (i32, i32) {
    %c1_i32 = arith.constant 1 : i32
    %0 = arith.muli %arg0, %c1_i32 : i32
    %1 = arith.addi %0, %arg1 : i32
    %c0_i32 = arith.constant 0 : i32
    %c0_i32_0 = arith.constant 0 : i32
    return %c0_i32, %1 : i32, i32
  }
  func.func @transform_3(%arg0: i32, %arg1: i32) -> (i32, i32, i32) {
    %c0_i32 = arith.constant 0 : i32
    %c0_i32_0 = arith.constant 0 : i32
    %c0_i32_1 = arith.constant 0 : i32
    return %arg0, %c0_i32, %c0_i32_0 : i32, i32, i32
  }
  func.func @transform_4(%arg0: i32, %arg1: i32) -> (i32, i32, i32) {
    %c0_i32 = arith.constant 0 : i32
    %c0_i32_0 = arith.constant 0 : i32
    %c0_i32_1 = arith.constant 0 : i32
    return %arg0, %c0_i32, %c0_i32_0 : i32, i32, i32
  }
}

module attributes {stable_mosaic.version = 11 : i64} {
  func.func @_bn_act_kernel(%arg0: i32, %arg1: memref<8x128xbf16, #tpu.memory_space<vmem>>, %arg2: memref<8x1xf32, #tpu.memory_space<vmem>>, %arg3: memref<8x1xf32, #tpu.memory_space<vmem>>, %arg4: memref<8x128xf32, #tpu.memory_space<vmem>>) attributes {dimension_semantics = [#tpu.dimension_semantics<parallel>], iteration_bounds = array<i64: 2>, scalar_prefetch = 0 : i64, scratch_operands = 0 : i64, tpu.core_type = #tpu.core_type<tc>, window_params = [{transform_indices = @transform_0, window_bounds = array<i64: 8, 128>}, {pipeline_mode = #tpu.pipeline_mode<synchronous>, transform_indices = @transform_1, window_bounds = array<i64: 8, 1>}, {pipeline_mode = #tpu.pipeline_mode<synchronous>, transform_indices = @transform_2, window_bounds = array<i64: 8, 1>}, {transform_indices = @transform_3, window_bounds = array<i64: 8, 128>}]} {
    %c0 = arith.constant 0 : index
    %c0_0 = arith.constant 0 : index
    %0 = vector.load %arg2[%c0, %c0_0] : memref<8x1xf32, #tpu.memory_space<vmem>>, vector<8x1xf32>
    %c0_1 = arith.constant 0 : index
    %c0_2 = arith.constant 0 : index
    %1 = vector.load %arg1[%c0_1, %c0_2] : memref<8x128xbf16, #tpu.memory_space<vmem>>, vector<8x128xbf16>
    %2 = arith.extf %1 : vector<8x128xbf16> to vector<8x128xf32>
    %3 = vector.broadcast %0 : vector<8x1xf32> to vector<8x128xf32>
    %4 = arith.mulf %3, %2 : vector<8x128xf32>
    %c0_3 = arith.constant 0 : index
    %c0_4 = arith.constant 0 : index
    %5 = vector.load %arg3[%c0_3, %c0_4] : memref<8x1xf32, #tpu.memory_space<vmem>>, vector<8x1xf32>
    %6 = vector.broadcast %5 : vector<8x1xf32> to vector<8x128xf32>
    %7 = arith.addf %4, %6 : vector<8x128xf32>
    %cst = arith.constant 0.000000e+00 : f32
    %8 = vector.broadcast %cst : f32 to vector<8x128xf32>
    %9 = arith.cmpf oge, %7, %8 : vector<8x128xf32>
    %cst_5 = arith.constant 2.000000e-01 : f32
    %10 = vector.broadcast %cst_5 : f32 to vector<8x128xf32>
    %11 = arith.mulf %10, %7 : vector<8x128xf32>
    %12 = arith.select %9, %7, %11 : vector<8x128xi1>, vector<8x128xf32>
    %c0_6 = arith.constant 0 : index
    %c0_7 = arith.constant 0 : index
    %13 = vector.load %arg4[%c0_6, %c0_7] : memref<8x128xf32, #tpu.memory_space<vmem>>, vector<8x128xf32>
    tpu.vector_store %arg4[%c0_6, %c0_7], %12 {strides = array<i32>} : memref<8x128xf32, #tpu.memory_space<vmem>>, vector<8x128xf32>,
    return
  }
  func.func @transform_0(%arg0: i32) -> (i32, i32) {
    %c0_i32 = arith.constant 0 : i32
    %c0_i32_0 = arith.constant 0 : i32
    return %c0_i32, %arg0 : i32, i32
  }
  func.func @transform_1(%arg0: i32) -> (i32, i32) {
    %c0_i32 = arith.constant 0 : i32
    %c0_i32_0 = arith.constant 0 : i32
    %c0_i32_1 = arith.constant 0 : i32
    return %c0_i32, %c0_i32_0 : i32, i32
  }
  func.func @transform_2(%arg0: i32) -> (i32, i32) {
    %c0_i32 = arith.constant 0 : i32
    %c0_i32_0 = arith.constant 0 : i32
    %c0_i32_1 = arith.constant 0 : i32
    return %c0_i32, %c0_i32_0 : i32, i32
  }
  func.func @transform_3(%arg0: i32) -> (i32, i32) {
    %c0_i32 = arith.constant 0 : i32
    %c0_i32_0 = arith.constant 0 : i32
    return %c0_i32, %arg0 : i32, i32
  }
}

</mosaic_0001>

<llo_original>
// kernel: conv3d_block.2
$region0: #{conv3d_block.2}
  #allocation0 [shape = 'u32[]', space=smem, size = 0x4, offset = 0x4, fixed_abs, tag = 'smem constant byte address 0x4 - core index']
  #allocation1 [shape = 'u32[144,128]{1,0:T(1,128)}', space=vmem, size = 0x12000, scoped, tag = 'internal scratch']
  %s0 = inlined_call_operand.vmem [shape: bf16[8,112], index: 0, kind: input, shape index: {}]
  %s1 = inlined_call_operand.vmem [shape: bf16[112,256], index: 1, kind: input, shape index: {}]
  %s2 = inlined_call_operand.vmem [shape: bf16[8,256], index: 2, kind: output, shape index: {0}]
  %s3 = inlined_call_operand.vmem [shape: f32[2,8,1], index: 3, kind: output, shape index: {1}]
  %s4 = inlined_call_operand.vmem [shape: f32[2,8,1], index: 4, kind: output, shape index: {2}]
  %5 = xla_tuple %s2, %s3, %s4
  %s6 = sld [smem:[#allocation0]]
  $region102: #{conv3d_block.2} parent=0
    _
  %s8 = ssub.s32 1, %s6
  %s9 = scalar_select 0, %s8, %s6
  $region1: #{conv3d_block.2} parent=0
    #allocation2 [shape = 'u8[57344]{0}', space=vmem, size = 0xe000, scoped, tag = 'input window, operand 1']
    loop: start=0, step=1, limit=4
    $region2: #{conv3d_block.2} parent=1 // loop_pre_header
      _
    $region3: #{conv3d_block.2} parent=1 // loop_header
      %s11 = sphi 0, %s15
      %p12 = scmp.ge.s32.totalorder %s11, 4
      %s18 = sphi 0, %s30
      %s19 = sphi 0, %s26
      %s20 = sphi 0, %s18
      %s21 = sphi 0, %s19
      %s22 = sphi 0, %s20
      %s23 = sphi 0, %s21
      %s31 = sphi 0, %s31
      %s33 = sphi 0, %s31
      %s34 = sphi 0, %s33
      %s48 = sphi 0, %s34
      %s56 = sphi 0, %s58
      %s59 = sphi 0, %s56
      %s60 = sphi 0, %s59
      %s76 = sphi 0, %s60
      %s84 = sphi 0, %s86
      %s87 = sphi 0, %s84
      %s88 = sphi 0, %s87
      %s104 = sphi 0, %s88
      %s110 = sphi 0, %s112
      %s113 = sphi 0, %s110
      %s114 = sphi 0, %s113
      %s130 = sphi 0, %s114
      %s136 = sphi 0, %s138
      %s139 = sphi 0, %s136
      %s140 = sphi 0, %s139
      %s156 = sphi 0, %s140
    $region4: #{conv3d_block.2} parent=1 // loop_header_branch
      %14 = sbr.rel (%p12) target = $region8
    $region5: #{conv3d_block.2} parent=1 // loop_body
      %s16 = ssub.s32 %s11, 1
      %s17 = ssub.s32 %s11, 2
      %s24 = sadd.s32 1, %s19
      %p25 = scmp.ge.s32.totalorder %s24, 1
      %s26 = scalar_select %p25, 0, %s24
      %s27 = sadd.s32 1, %s18
      %s28 = scalar_select %p25, %s27, %s18
      %p29 = scmp.ge.s32.totalorder %s28, 2
      %s30 = scalar_select %p29, 0, %s28
      %s32 = sadd.s32 %s31, 1
      %p35 = scmp.eq.s32.totalorder %s11, 1
      %p36 = scmp.ne.s32.totalorder %s31, %s33
      %p37 = scmp.eq.s32.totalorder %s11, 0
      %p38 = por %p36, %p37
      %p39 = scmp.ne.s32.totalorder %s31, %s33
      %p40 = scmp.eq.s32.totalorder %s16, 1
      %p41 = por %p39, %p40
      %p42 = scmp.ne.s32.totalorder %s33, %s34
      %p43 = scmp.eq.s32.totalorder %s16, 0
      %p44 = por %p42, %p43
      %p45 = scmp.ne.s32.totalorder %s33, %s34
      %p46 = scmp.eq.s32.totalorder %s17, 1
      %p47 = por %p45, %p46
      %p49 = scmp.ne.s32.totalorder %s34, %s48
      %p50 = scmp.eq.s32.totalorder %s17, 0
      %p51 = por %p49, %p50
      %s52 = sadd.s32 %s18, %s19
      %s53 = sadd.s32 %s30, %s26
      %s54 = ssub.s32 %s52, %s53
      %p55 = scmp.eq.s32.totalorder %s54, 0
      %s57 = sadd.s32 %s56, 1
      %s58 = scalar_select %p55, %s56, %s57
      %p61 = pneg %p55
      %p62 = scmp.eq.s32.totalorder %s11, 1
      %p63 = por %p61, %p62
      %p64 = scmp.ne.s32.totalorder %s56, %s59
      %p65 = scmp.eq.s32.totalorder %s11, 0
      %p66 = por %p64, %p65
      %p67 = scmp.ne.s32.totalorder %s56, %s59
      %p68 = scmp.eq.s32.totalorder %s16, 1
      %p69 = por %p67, %p68
      %p70 = scmp.ne.s32.totalorder %s59, %s60
      %p71 = scmp.eq.s32.totalorder %s16, 0
      %p72 = por %p70, %p71
      %p73 = scmp.ne.s32.totalorder %s59, %s60
      %p74 = scmp.eq.s32.totalorder %s17, 1
      %p75 = por %p73, %p74
      %p77 = scmp.ne.s32.totalorder %s60, %s76
      %p78 = scmp.eq.s32.totalorder %s17, 0
      %p79 = por %p77, %p78
      %s80 = sadd.s32 %s18, %s19
      %s81 = sadd.s32 %s30, %s26
      %s82 = ssub.s32 %s80, %s81
      %p83 = scmp.eq.s32.totalorder %s82, 0
      %s85 = sadd.s32 %s84, 1
      %s86 = scalar_select %p83, %s84, %s85
      %p89 = pneg %p83
      %p90 = scmp.eq.s32.totalorder %s11, 1
      %p91 = por %p89, %p90
      %p92 = scmp.ne.s32.totalorder %s84, %s87
      %p93 = scmp.eq.s32.totalorder %s11, 0
      %p94 = por %p92, %p93
      %p95 = scmp.ne.s32.totalorder %s84, %s87
      %p96 = scmp.eq.s32.totalorder %s16, 1
      %p97 = por %p95, %p96
      %p98 = scmp.ne.s32.totalorder %s87, %s88
      %p99 = scmp.eq.s32.totalorder %s16, 0
      %p100 = por %p98, %p99
      %p101 = scmp.ne.s32.totalorder %s87, %s88
      %p102 = scmp.eq.s32.totalorder %s17, 1
      %p103 = por %p101, %p102
      %p105 = scmp.ne.s32.totalorder %s88, %s104
      %p106 = scmp.eq.s32.totalorder %s17, 0
      %p107 = por %p105, %p106
      %s108 = ssub.s32 %s18, %s30
      %p109 = scmp.eq.s32.totalorder %s108, 0
      %s111 = sadd.s32 %s110, 1
      %s112 = scalar_select %p109, %s110, %s111
      %p115 = pneg %p109
      %p116 = scmp.eq.s32.totalorder %s11, 1
      %p117 = por %p115, %p116
      %p118 = scmp.ne.s32.totalorder %s110, %s113
      %p119 = scmp.eq.s32.totalorder %s11, 0
      %p120 = por %p118, %p119
      %p121 = scmp.ne.s32.totalorder %s110, %s113
      %p122 = scmp.eq.s32.totalorder %s16, 1
      %p123 = por %p121, %p122
      %p124 = scmp.ne.s32.totalorder %s113, %s114
      %p125 = scmp.eq.s32.totalorder %s16, 0
      %p126 = por %p124, %p125
      %p127 = scmp.ne.s32.totalorder %s113, %s114
      %p128 = scmp.eq.s32.totalorder %s17, 1
      %p129 = por %p127, %p128
      %p131 = scmp.ne.s32.totalorder %s114, %s130
      %p132 = scmp.eq.s32.totalorder %s17, 0
      %p133 = por %p131, %p132
      %s134 = ssub.s32 %s18, %s30
      %p135 = scmp.eq.s32.totalorder %s134, 0
      %s137 = sadd.s32 %s136, 1
      %s138 = scalar_select %p135, %s136, %s137
      %p141 = pneg %p135
      %p142 = scmp.eq.s32.totalorder %s11, 1
      %p143 = por %p141, %p142
      %p144 = scmp.ne.s32.totalorder %s136, %s139
      %p145 = scmp.eq.s32.totalorder %s11, 0
      %p146 = por %p144, %p145
      %p147 = scmp.ne.s32.totalorder %s136, %s139
      %p148 = scmp.eq.s32.totalorder %s16, 1
      %p149 = por %p147, %p148
      %p150 = scmp.ne.s32.totalorder %s139, %s140
      %p151 = scmp.eq.s32.totalorder %s16, 0
      %p152 = por %p150, %p151
      %p153 = scmp.ne.s32.totalorder %s139, %s140
      %p154 = scmp.eq.s32.totalorder %s17, 1
      %p155 = por %p153, %p154
      %p157 = scmp.ne.s32.totalorder %s140, %s156
      %p158 = scmp.eq.s32.totalorder %s17, 0
      %p159 = por %p157, %p158
      %p160 = scmp.le.s32.totalorder 1, %s11
      %p161 = scmp.lt.s32.totalorder %s11, 3
      %p162 = pnand %p160, %p161
      %p163 = pneg %p162
      // Predicated region
      $region9: #{conv3d_block.2} parent=5 // pred_check
        _
      $region10: #{conv3d_block.2} parent=5 // pred_check_branch
        %165 = sbr.rel (%p162) target = $region12
      $region11: #{conv3d_block.2} parent=5 // pred_region
        %s166 = ssub.s32 %s11, 1
        // Predicated region
        $region13: #{conv3d_block.2} parent=11 // pred_check
          %p167 = pneg %p44
        $region14: #{conv3d_block.2} parent=11 // pred_check_branch
          %169 = sbr.rel (%p167) target = $region16
        $region15: #{conv3d_block.2} parent=11 // pred_region
          _
        $region16: #{conv3d_block.2} parent=11 // pred_fallthru
          _
      $region12: #{conv3d_block.2} parent=5 // pred_fallthru
        _
      %p170 = scmp.lt.s32.totalorder %s11, 2
      // Predicated region
      $region17: #{conv3d_block.2} parent=5 // pred_check
        %p171 = pneg %p170
      $region18: #{conv3d_block.2} parent=5 // pred_check_branch
        %173 = sbr.rel (%p171) target = $region20
      $region19: #{conv3d_block.2} parent=5 // pred_region
        // Predicated region
        $region21: #{conv3d_block.2} parent=19 // pred_check
          %p174 = pneg %p66
        $region22: #{conv3d_block.2} parent=19 // pred_check_branch
          %176 = sbr.rel (%p174) target = $region24
        $region23: #{conv3d_block.2} parent=19 // pred_region
          %s177 = sand.u32 %s56, 1
          %s178 = sand.u32 %s56, 1
          %s179 = smul.addr %s178, 56
          %s180 = scalar_lea.vmem [#allocation2], %s179
          %s181 = sadd.s32 %s18, %s19
          %s182 = smul.addr %s181, 4
          %s183 = scalar_lea.vmem %s1, %s182
          // Predicated region
          $region25: #{conv3d_block.2} parent=23 // pred_check
            _
          $region26: #{conv3d_block.2} parent=23 // pred_check_branch
            %185 = sbr.rel (0) target = $region28
          $region27: #{conv3d_block.2} parent=23 // pred_region
            // Predicated region
            $region29: #{conv3d_block.2} parent=27 // pred_check
              _
            $region30: #{conv3d_block.2} parent=27 // pred_check_branch
              %187 = sbr.rel target = $region32
            $region31: #{conv3d_block.2} parent=27 // pred_region
              // Predicated region
              $region44: #{conv3d_block.2} parent=31 // pred_check
                _
              $region45: #{conv3d_block.2} parent=31 // pred_check_branch
                %228 = sbr.rel (0) target = $region47
              $region46: #{conv3d_block.2} parent=31 // pred_region
                loop: start=0, step=1, limit=1
                $region48: #{conv3d_block.2} parent=46 // loop_pre_header
                  _
                $region49: #{conv3d_block.2} parent=46 // loop_header
                  %s230 = sphi 0, %s234
                  %p231 = scmp.ge.s32.totalorder %s230, 1
                  %s235 = sphi %s183, %s183
                  %s236 = sphi %s180, %s180
                $region50: #{conv3d_block.2} parent=46 // loop_header_branch
                  %233 = sbr.rel (%p231) target = $region54
                $region51: #{conv3d_block.2} parent=46 // loop_body
                  _
                $region52: #{conv3d_block.2} parent=46 // loop_footer
                  %s234 = sadd.s32 1, %s230
                $region53: #{conv3d_block.2} parent=46 // loop_footer_branch
                  %229 = sbr.rel target = $region49
                $region54: #{conv3d_block.2} parent=46 // loop_exit
                  _
                loop: start=0, step=1, limit=1
                $region55: #{conv3d_block.2} parent=46 // loop_pre_header
                  _
                $region56: #{conv3d_block.2} parent=46 // loop_header
                  %s239 = sphi 0, %s243
                  %p240 = scmp.ge.s32.totalorder %s239, 1
                  %s244 = sphi %s183, %s183
                  %s245 = sphi %s180, %s180
                $region57: #{conv3d_block.2} parent=46 // loop_header_branch
                  %242 = sbr.rel (%p240) target = $region61
                $region58: #{conv3d_block.2} parent=46 // loop_body
                  %v246 = vld [vmem:[%s244] sm:$0xf]
                  %247 = vst [vmem:[%s245] sm:$0xf] %v246
                  %v248 = vld [vmem:[%s244 + $0x8] sm:$0xf]
                  %249 = vst [vmem:[%s245 + $0x4] sm:$0xf] %v248
                  %v250 = vld [vmem:[%s244 + $0x10] sm:$0xf]
                  %251 = vst [vmem:[%s245 + $0x8] sm:$0xf] %v250
                  %v252 = vld [vmem:[%s244 + $0x18] sm:$0xf]
                  %253 = vst [vmem:[%s245 + $0xc] sm:$0xf] %v252
                  %v254 = vld [vmem:[%s244 + $0x20] sm:$0xf]
                  %255 = vst [vmem:[%s245 + $0x10] sm:$0xf] %v254
                  %v256 = vld [vmem:[%s244 + $0x28] sm:$0xf]
                  %257 = vst [vmem:[%s245 + $0x14] sm:$0xf] %v256
                  %v258 = vld [vmem:[%s244 + $0x30] sm:$0xf]
                  %259 = vst [vmem:[%s245 + $0x18] sm:$0xf] %v258
                  %v260 = vld [vmem:[%s244 + $0x38] sm:$0xf]
                  %261 = vst [vmem:[%s245 + $0x1c] sm:$0xf] %v260
                  %v262 = vld [vmem:[%s244 + $0x40] sm:$0xf]
                  %263 = vst [vmem:[%s245 + $0x20] sm:$0xf] %v262
                  %v264 = vld [vmem:[%s244 + $0x48] sm:$0xf]
                  %265 = vst [vmem:[%s245 + $0x24] sm:$0xf] %v264
                  %v266 = vld [vmem:[%s244 + $0x50] sm:$0xf]
                  %267 = vst [vmem:[%s245 + $0x28] sm:$0xf] %v266
                  %v268 = vld [vmem:[%s244 + $0x58] sm:$0xf]
                  %269 = vst [vmem:[%s245 + $0x2c] sm:$0xf] %v268
                  %v270 = vld [vmem:[%s244 + $0x60] sm:$0xf]
                  %271 = vst [vmem:[%s245 + $0x30] sm:$0xf] %v270
                  %v272 = vld [vmem:[%s244 + $0x68] sm:$0xf]
                  %273 = vst [vmem:[%s245 + $0x34] sm:$0xf] %v272
                $region59: #{conv3d_block.2} parent=46 // loop_footer
                  %s243 = sadd.s32 1, %s239
                $region60: #{conv3d_block.2} parent=46 // loop_footer_branch
                  %238 = sbr.rel target = $region56
                $region61: #{conv3d_block.2} parent=46 // loop_exit
                  _
              $region47: #{conv3d_block.2} parent=31 // pred_fallthru
                _
            $region32: #{conv3d_block.2} parent=27 // pred_fallthru
              _
            // Predicated region
            $region33: #{conv3d_block.2} parent=27 // pred_check
              _
            $region34: #{conv3d_block.2} parent=27 // pred_check_branch
              %189 = sbr.rel (0) target = $region36
            $region35: #{conv3d_block.2} parent=27 // pred_region
              loop: start=0, step=1, limit=1
              $region37: #{conv3d_block.2} parent=35 // loop_pre_header
                _
              $region38: #{conv3d_block.2} parent=35 // loop_header
                %s192 = sphi 0, %s196
                %p193 = scmp.ge.s32.totalorder %s192, 1
                %s197 = sphi %s183, %s183
                %s198 = sphi %s180, %s180
              $region39: #{conv3d_block.2} parent=35 // loop_header_branch
                %195 = sbr.rel (%p193) target = $region43
              $region40: #{conv3d_block.2} parent=35 // loop_body
                %v199 = vld [vmem:[%s197] sm:$0xf]
                %200 = vst [vmem:[%s198] sm:$0xf] %v199
                %v201 = vld [vmem:[%s197 + $0x8] sm:$0xf]
                %202 = vst [vmem:[%s198 + $0x4] sm:$0xf] %v201
                %v203 = vld [vmem:[%s197 + $0x10] sm:$0xf]
                %204 = vst [vmem:[%s198 + $0x8] sm:$0xf] %v203
                %v205 = vld [vmem:[%s197 + $0x18] sm:$0xf]
                %206 = vst [vmem:[%s198 + $0xc] sm:$0xf] %v205
                %v207 = vld [vmem:[%s197 + $0x20] sm:$0xf]
                %208 = vst [vmem:[%s198 + $0x10] sm:$0xf] %v207
                %v209 = vld [vmem:[%s197 + $0x28] sm:$0xf]
                %210 = vst [vmem:[%s198 + $0x14] sm:$0xf] %v209
                %v211 = vld [vmem:[%s197 + $0x30] sm:$0xf]
                %212 = vst [vmem:[%s198 + $0x18] sm:$0xf] %v211
                %v213 = vld [vmem:[%s197 + $0x38] sm:$0xf]
                %214 = vst [vmem:[%s198 + $0x1c] sm:$0xf] %v213
                %v215 = vld [vmem:[%s197 + $0x40] sm:$0xf]
                %216 = vst [vmem:[%s198 + $0x20] sm:$0xf] %v215
                %v217 = vld [vmem:[%s197 + $0x48] sm:$0xf]
                %218 = vst [vmem:[%s198 + $0x24] sm:$0xf] %v217
                %v219 = vld [vmem:[%s197 + $0x50] sm:$0xf]
                %220 = vst [vmem:[%s198 + $0x28] sm:$0xf] %v219
                %v221 = vld [vmem:[%s197 + $0x58] sm:$0xf]
                %222 = vst [vmem:[%s198 + $0x2c] sm:$0xf] %v221
                %v223 = vld [vmem:[%s197 + $0x60] sm:$0xf]
                %224 = vst [vmem:[%s198 + $0x30] sm:$0xf] %v223
                %v225 = vld [vmem:[%s197 + $0x68] sm:$0xf]
                %226 = vst [vmem:[%s198 + $0x34] sm:$0xf] %v225
              $region41: #{conv3d_block.2} parent=35 // loop_footer
                %s196 = sadd.s32 1, %s192
              $region42: #{conv3d_block.2} parent=35 // loop_footer_branch
                %191 = sbr.rel target = $region38
              $region43: #{conv3d_block.2} parent=35 // loop_exit
                _
            $region36: #{conv3d_block.2} parent=27 // pred_fallthru
              _
          $region28: #{conv3d_block.2} parent=23 // pred_fallthru
            _
          %274 = vnop
        $region24: #{conv3d_block.2} parent=19 // pred_fallthru
          _
      $region20: #{conv3d_block.2} parent=5 // pred_fallthru
        _
      %p275 = scmp.le.s32.totalorder 1, %s11
      %p276 = scmp.lt.s32.totalorder %s11, 3
      %p277 = pnand %p275, %p276
      %p278 = pneg %p277
      // Predicated region
      $region62: #{conv3d_block.2} parent=5 // pred_check
        _
      $region63: #{conv3d_block.2} parent=5 // pred_check_branch
        %280 = sbr.rel (%p277) target = $region65
      $region64: #{conv3d_block.2} parent=5 // pred_region
        %s281 = ssub.s32 %s11, 1
        %s282 = sand.u32 %s59, 1
        %s283 = sand.u32 %s59, 1
        %s284 = smul.addr %s283, 56
        %s285 = scalar_lea.vmem [#allocation2], %s284
        // Predicated region
        $region66: #{conv3d_block.2} parent=64 // pred_check
          %p286 = pneg %p72
        $region67: #{conv3d_block.2} parent=64 // pred_check_branch
          %288 = sbr.rel (%p286) target = $region69
        $region68: #{conv3d_block.2} parent=64 // pred_region
          _
        $region69: #{conv3d_block.2} parent=64 // pred_fallthru
          _
        %p289 = pneg %p44
        %p290 = pneg %p41
        %s291 = sand.u32 %s59, 1
        %s292 = sand.u32 %s59, 1
        %s293 = smul.addr %s292, 56
        %s294 = scalar_lea.vmem [#allocation2], %s293
        %p295 = pneg %p72
        %p296 = pneg %p69
        %p297 = pneg %p100
        %p298 = pneg %p97
        %s299 = sadd.s32 %s20, %s21
        %p300 = scmp.lt.s32.totalorder %s299, 1
        %s301 = scalar_select %p300, %s299, 1
        %s302 = smul.addr %s301, 4
        %s303 = scalar_lea.vmem %s2, %s302
        %p304 = pneg %p126
        %p305 = pneg %p123
        %p306 = scmp.lt.s32.totalorder %s20, 1
        %s307 = scalar_select %p306, %s20, 1
        %s308 = smul.addr %s307, 8
        %s309 = scalar_lea.vmem %s3, %s308
        %p310 = pneg %p152
        %p311 = pneg %p149
        %p312 = scmp.lt.s32.totalorder %s20, 1
        %s313 = scalar_select %p312, %s20, 1
        %s314 = smul.addr %s313, 8
        %s315 = scalar_lea.vmem %s4, %s314
        %s316 = sadd.s32 %s20, %s21
        %s317 = sadd.s32 %s20, %s21
        %p318 = scmp.lt.s32.totalorder %s317, 1
        %s319 = scalar_select %p318, %s317, 1
        %s320 = smul.addr %s319, 4
        %s321 = scalar_lea.vmem %s2, %s320
        %s322 = sadd.s32 %s20, %s21
        %p323 = scmp.lt.s32.totalorder %s20, 1
        %s324 = scalar_select %p323, %s20, 1
        %s325 = smul.addr %s324, 8
        %s326 = scalar_lea.vmem %s3, %s325
        %p327 = scmp.lt.s32.totalorder %s20, 1
        %s328 = scalar_select %p327, %s20, 1
        %s329 = smul.addr %s328, 8
        %s330 = scalar_lea.vmem %s4, %s329
        %p332 = scmp.eq.s32.totalorder %s21, 0
        // Predicated region
        $region70: #{conv3d_block.2} parent=64 // pred_check
          %p333 = pneg %p332
        $region71: #{conv3d_block.2} parent=64 // pred_check_branch
          %335 = sbr.rel (%p333) target = $region73
        $region72: #{conv3d_block.2} parent=64 // pred_region
          %vm336 = vcmask 7168
          %337 = vst.msk [vmem:[%s326] sm:$0xff] %vm336, 0.0
          %338 = vst.msk [vmem:[%s330] sm:$0xff] %vm336, 0.0
        $region73: #{conv3d_block.2} parent=64 // pred_fallthru
          _
        %v339 = vld [vmem:[%s0] sm:$0xf]
        %v340 = vld [vmem:[%s285] sm:$0xf]
        %v341 = vld [vmem:[%s285 + $0x4] sm:$0xf]
        %v342 = vld [vmem:[%s285 + $0x8] sm:$0xf]
        %v343 = vld [vmem:[%s285 + $0xc] sm:$0xf]
        %v344 = vld [vmem:[%s285 + $0x10] sm:$0xf]
        %v345 = vld [vmem:[%s285 + $0x14] sm:$0xf]
        %v346 = vld [vmem:[%s285 + $0x18] sm:$0xf]
        %v347 = vld [vmem:[%s285 + $0x1c] sm:$0xf]
        %v348 = vld [vmem:[%s285 + $0x20] sm:$0xf]
        %v349 = vld [vmem:[%s285 + $0x24] sm:$0xf]
        %v350 = vld [vmem:[%s285 + $0x28] sm:$0xf]
        %v351 = vld [vmem:[%s285 + $0x2c] sm:$0xf]
        %v352 = vld [vmem:[%s285 + $0x30] sm:$0xf]
        %v353 = vld [vmem:[%s285 + $0x34] sm:$0xf]
        %v368 = vunpack.c.l.b16 %v340
        %v369 = vunpack.c.l.b16 %v341
        %v370 = vunpack.c.l.b16 %v342
        %v371 = vunpack.c.l.b16 %v343
        %v372 = vunpack.c.l.b16 %v344
        %v373 = vunpack.c.l.b16 %v345
        %v374 = vunpack.c.l.b16 %v346
        %v375 = vunpack.c.l.b16 %v347
        %v376 = vunpack.c.l.b16 %v348
        %v377 = vunpack.c.l.b16 %v349
        %v378 = vunpack.c.l.b16 %v350
        %v379 = vunpack.c.l.b16 %v351
        %v380 = vunpack.c.l.b16 %v352
        %v381 = vunpack.c.l.b16 %v353
        %v382 = vpack.c.b16 %v369, %v368
        %v383 = vpack.c.b16 %v371, %v370
        %v384 = vpack.c.b16 %v373, %v372
        %v385 = vpack.c.b16 %v375, %v374
        %v386 = vpack.c.b16 %v377, %v376
        %v387 = vpack.c.b16 %v379, %v378
        %v388 = vpack.c.b16 %v381, %v380
        %vm396 = vcmask 916480
        %v398 = vsel %vm396, %v339, 0
        %400 = vmatprep.subr.bf16.mxu0 0
        %401 = vmatpush1.bf16.msra.mxu0 %v382
        %402 = vmatprep.subr.bf16.mxu0 0
        %403 = vmatpush1.bf16.msra.mxu0 %v383
        %404 = vmatprep.subr.bf16.mxu0 0
        %405 = vmatpush1.bf16.msra.mxu0 %v384
        %406 = vmatprep.subr.bf16.mxu0 0
        %407 = vmatpush1.bf16.msra.mxu0 %v385
        %408 = vmatprep.subr.bf16.mxu0 0
        %409 = vmatpush1.bf16.msra.mxu0 %v386
        %410 = vmatprep.subr.bf16.mxu0 0
        %411 = vmatpush1.bf16.msra.mxu0 %v387
        %412 = vmatprep.subr.bf16.mxu0 0
        %413 = vmatpush1.bf16.msra.mxu0 %v388
        %414 = vmatprep.subr.bf16.mxu0 0
        %415 = vmatpush1.bf16.msra.mxu0 0
        %416 = vmatprep.subr.bf16.mxu0 0
        %417 = vmatpush1.bf16.msra.mxu0 0
        %418 = vmatprep.subr.bf16.mxu0 0
        %419 = vmatpush1.bf16.msra.mxu0 0
        %420 = vmatprep.subr.bf16.mxu0 0
        %421 = vmatpush1.bf16.msra.mxu0 0
        %422 = vmatprep.subr.bf16.mxu0 0
        %423 = vmatpush1.bf16.msra.mxu0 0
        %424 = vmatprep.subr.bf16.mxu0 0
        %425 = vmatpush1.bf16.msra.mxu0 0
        %426 = vmatprep.subr.bf16.mxu0 0
        %427 = vmatpush1.bf16.msra.mxu0 0
        %428 = vmatprep.subr.bf16.mxu0 0
        %429 = vmatpush1.bf16.msra.mxu0 0
        %430 = vmatprep.subr.bf16.mxu0 0
        %431 = vmatpush1.bf16.msra.mxu0 0
        %432 = vmatprep.mubr.bf16.mxu0 0
        %433 = vmatmul.mubr.bf16.gmra.mrb[0].mxu0 %v398
        %v434 = vpop.f32.mrb[0].mxu0
        %v435 = vadd.f32 0.0, %v434
        %v436 = vpop.f32.mrb[0].mxu0
        %v437 = vpop.f32.mrb[0].mxu0
        %v438 = vpop.f32.mrb[0].mxu0
        %439 = vdwg.mxu0
        %v440 = vpack.c.bf16 %v435, %v435
        %441 = vst [vmem:[%s321] sm:$0xf] %v440
        %v442 = vld [vmem:[%s326] sm:$0xff]
        %443 = vadd.xlane.f32.xlu0 %v435
        %v444 = vpop.xlane.xlu0 %443
        %v445 = vadd.f32 %v442, %v444
        %vm446 = vcmask 7168
        %447 = vst.msk [vmem:[%s326] sm:$0xff] %vm446, %v445
        %v448 = vld [vmem:[%s330] sm:$0xff]
        %v449 = vmul.f32 %v435, %v435
        %450 = vadd.xlane.f32.xlu0 %v449
        %v451 = vpop.xlane.xlu0 %450
        %v452 = vadd.f32 %v448, %v451
        %453 = vst.msk [vmem:[%s330] sm:$0xff] %vm446, %v452
        %s454 = sadd.s32 %s20, %s21
        %p455 = scmp.lt.s32.totalorder %s454, 1
        %s456 = scalar_select %p455, %s454, 1
        %s457 = smul.addr %s456, 4
        %s458 = scalar_lea.vmem %s2, %s457
        %p459 = scmp.lt.s32.totalorder %s20, 1
        %s460 = scalar_select %p459, %s20, 1
        %s461 = smul.addr %s460, 8
        %s462 = scalar_lea.vmem %s3, %s461
        %p463 = scmp.lt.s32.totalorder %s20, 1
        %s464 = scalar_select %p463, %s20, 1
        %s465 = smul.addr %s464, 8
        %s466 = scalar_lea.vmem %s4, %s465
        // Predicated region
        $region74: #{conv3d_block.2} parent=64 // pred_check
          %p467 = pneg %p97
        $region75: #{conv3d_block.2} parent=64 // pred_check_branch
          %469 = sbr.rel (%p467) target = $region77
        $region76: #{conv3d_block.2} parent=64 // pred_region
          %s470 = sadd.s32 %s20, %s21
        $region77: #{conv3d_block.2} parent=64 // pred_fallthru
          _
        // Predicated region
        $region78: #{conv3d_block.2} parent=64 // pred_check
          %p471 = pneg %p123
        $region79: #{conv3d_block.2} parent=64 // pred_check_branch
          %473 = sbr.rel (%p471) target = $region81
        $region80: #{conv3d_block.2} parent=64 // pred_region
          _
        $region81: #{conv3d_block.2} parent=64 // pred_fallthru
          _
        // Predicated region
        $region82: #{conv3d_block.2} parent=64 // pred_check
          %p474 = pneg %p149
        $region83: #{conv3d_block.2} parent=64 // pred_check_branch
          %476 = sbr.rel (%p474) target = $region85
        $region84: #{conv3d_block.2} parent=64 // pred_region
          _
        $region85: #{conv3d_block.2} parent=64 // pred_fallthru
          _
      $region65: #{conv3d_block.2} parent=5 // pred_fallthru
        _
      %p477 = scmp.le.s32.totalorder 2, %s11
      // Predicated region
      $region86: #{conv3d_block.2} parent=5 // pred_check
        %p478 = pneg %p477
      $region87: #{conv3d_block.2} parent=5 // pred_check_branch
        %480 = sbr.rel (%p478) target = $region89
      $region88: #{conv3d_block.2} parent=5 // pred_region
        %s481 = ssub.s32 %s11, 2
        // Predicated region
        $region90: #{conv3d_block.2} parent=88 // pred_check
          %p482 = pneg %p103
        $region91: #{conv3d_block.2} parent=88 // pred_check_branch
          %484 = sbr.rel (%p482) target = $region93
        $region92: #{conv3d_block.2} parent=88 // pred_region
          %s485 = sadd.s32 %s22, %s23
          %p486 = scmp.lt.s32.totalorder %s485, 1
          %s487 = scalar_select %p486, %s485, 1
          %s488 = smul.addr %s487, 4
          %s489 = scalar_lea.vmem %s2, %s488
        $region93: #{conv3d_block.2} parent=88 // pred_fallthru
          _
        // Predicated region
        $region94: #{conv3d_block.2} parent=88 // pred_check
          %p490 = pneg %p129
        $region95: #{conv3d_block.2} parent=88 // pred_check_branch
          %492 = sbr.rel (%p490) target = $region97
        $region96: #{conv3d_block.2} parent=88 // pred_region
          %p493 = scmp.lt.s32.totalorder %s22, 1
          %s494 = scalar_select %p493, %s22, 1
          %s495 = smul.addr %s494, 8
          %s496 = scalar_lea.vmem %s3, %s495
        $region97: #{conv3d_block.2} parent=88 // pred_fallthru
          _
        // Predicated region
        $region98: #{conv3d_block.2} parent=88 // pred_check
          %p497 = pneg %p155
        $region99: #{conv3d_block.2} parent=88 // pred_check_branch
          %499 = sbr.rel (%p497) target = $region101
        $region100: #{conv3d_block.2} parent=88 // pred_region
          %p500 = scmp.lt.s32.totalorder %s22, 1
          %s501 = scalar_select %p500, %s22, 1
          %s502 = smul.addr %s501, 8
          %s503 = scalar_lea.vmem %s4, %s502
        $region101: #{conv3d_block.2} parent=88 // pred_fallthru
          _
      $region89: #{conv3d_block.2} parent=5 // pred_fallthru
        _
    $region6: #{conv3d_block.2} parent=1 // loop_footer
      %s15 = sadd.s32 1, %s11
    $region7: #{conv3d_block.2} parent=1 // loop_footer_branch
      %10 = sbr.rel target = $region3
    $region8: #{conv3d_block.2} parent=1 // loop_exit
      _

// kernel: conv3d_block.3
$region0: #{conv3d_block.3}
  #allocation0 [shape = 'u32[]', space=smem, size = 0x4, offset = 0x4, fixed_abs, tag = 'smem constant byte address 0x4 - core index']
  #allocation1 [shape = 'u32[144,128]{1,0:T(1,128)}', space=vmem, size = 0x12000, scoped, tag = 'internal scratch']
  %s0 = inlined_call_operand.vmem [shape: bf16[8,256], index: 0, kind: input, shape index: {}]
  %s1 = inlined_call_operand.vmem [shape: f32[8,1], index: 1, kind: input, shape index: {}]
  %s2 = inlined_call_operand.vmem [shape: f32[8,1], index: 2, kind: input, shape index: {}]
  %s3 = inlined_call_operand.vmem [shape: f32[8,256], index: 3, kind: output, shape index: {}]
  %s4 = sld [smem:[#allocation0]]
  $region45: #{conv3d_block.3} parent=0
    _
  %s6 = ssub.s32 1, %s4
  %s7 = scalar_select 0, %s6, %s4
  loop: start=0, step=1, limit=4
  $region2: #{conv3d_block.3} parent=0 // loop_pre_header
    _
  $region3: #{conv3d_block.3} parent=0 // loop_header
    %s9 = sphi 0, %s13
    %p10 = scmp.ge.s32.totalorder %s9, 4
    %s19 = sphi 0, %s21
    %s22 = sphi 0, %s19
    %s23 = sphi 0, %s22
    %s39 = sphi 0, %s23
    %s43 = sphi 0, %s43
    %s45 = sphi 0, %s43
    %s46 = sphi 0, %s45
    %s60 = sphi 0, %s46
    %s64 = sphi 0, %s64
    %s66 = sphi 0, %s64
    %s67 = sphi 0, %s66
    %s81 = sphi 0, %s67
    %s87 = sphi 0, %s89
    %s90 = sphi 0, %s87
    %s91 = sphi 0, %s90
    %s107 = sphi 0, %s91
  $region4: #{conv3d_block.3} parent=0 // loop_header_branch
    %12 = sbr.rel (%p10) target = $region8
  $region5: #{conv3d_block.3} parent=0 // loop_body
    %s14 = ssub.s32 %s9, 1
    %s15 = ssub.s32 %s9, 2
    %s16 = sadd.s32 %s9, 1
    %s17 = ssub.s32 %s9, %s16
    %p18 = scmp.eq.s32.totalorder %s17, 0
    %s20 = sadd.s32 %s19, 1
    %s21 = scalar_select %p18, %s19, %s20
    %p24 = pneg %p18
    %p25 = scmp.eq.s32.totalorder %s9, 1
    %p26 = por %p24, %p25
    %p27 = scmp.ne.s32.totalorder %s19, %s22
    %p28 = scmp.eq.s32.totalorder %s9, 0
    %p29 = por %p27, %p28
    %p30 = scmp.ne.s32.totalorder %s19, %s22
    %p31 = scmp.eq.s32.totalorder %s14, 1
    %p32 = por %p30, %p31
    %p33 = scmp.ne.s32.totalorder %s22, %s23
    %p34 = scmp.eq.s32.totalorder %s14, 0
    %p35 = por %p33, %p34
    %p36 = scmp.ne.s32.totalorder %s22, %s23
    %p37 = scmp.eq.s32.totalorder %s15, 1
    %p38 = por %p36, %p37
    %p40 = scmp.ne.s32.totalorder %s23, %s39
    %p41 = scmp.eq.s32.totalorder %s15, 0
    %p42 = por %p40, %p41
    %s44 = sadd.s32 %s43, 1
    %p47 = scmp.eq.s32.totalorder %s9, 1
    %p48 = scmp.ne.s32.totalorder %s43, %s45
    %p49 = scmp.eq.s32.totalorder %s9, 0
    %p50 = por %p48, %p49
    %p51 = scmp.ne.s32.totalorder %s43, %s45
    %p52 = scmp.eq.s32.totalorder %s14, 1
    %p53 = por %p51, %p52
    %p54 = scmp.ne.s32.totalorder %s45, %s46
    %p55 = scmp.eq.s32.totalorder %s14, 0
    %p56 = por %p54, %p55
    %p57 = scmp.ne.s32.totalorder %s45, %s46
    %p58 = scmp.eq.s32.totalorder %s15, 1
    %p59 = por %p57, %p58
    %p61 = scmp.ne.s32.totalorder %s46, %s60
    %p62 = scmp.eq.s32.totalorder %s15, 0
    %p63 = por %p61, %p62
    %s65 = sadd.s32 %s64, 1
    %p68 = scmp.eq.s32.totalorder %s9, 1
    %p69 = scmp.ne.s32.totalorder %s64, %s66
    %p70 = scmp.eq.s32.totalorder %s9, 0
    %p71 = por %p69, %p70
    %p72 = scmp.ne.s32.totalorder %s64, %s66
    %p73 = scmp.eq.s32.totalorder %s14, 1
    %p74 = por %p72, %p73
    %p75 = scmp.ne.s32.totalorder %s66, %s67
    %p76 = scmp.eq.s32.totalorder %s14, 0
    %p77 = por %p75, %p76
    %p78 = scmp.ne.s32.totalorder %s66, %s67
    %p79 = scmp.eq.s32.totalorder %s15, 1
    %p80 = por %p78, %p79
    %p82 = scmp.ne.s32.totalorder %s67, %s81
    %p83 = scmp.eq.s32.totalorder %s15, 0
    %p84 = por %p82, %p83
    %s85 = ssub.s32 %s9, %s16
    %p86 = scmp.eq.s32.totalorder %s85, 0
    %s88 = sadd.s32 %s87, 1
    %s89 = scalar_select %p86, %s87, %s88
    %p92 = pneg %p86
    %p93 = scmp.eq.s32.totalorder %s9, 1
    %p94 = por %p92, %p93
    %p95 = scmp.ne.s32.totalorder %s87, %s90
    %p96 = scmp.eq.s32.totalorder %s9, 0
    %p97 = por %p95, %p96
    %p98 = scmp.ne.s32.totalorder %s87, %s90
    %p99 = scmp.eq.s32.totalorder %s14, 1
    %p100 = por %p98, %p99
    %p101 = scmp.ne.s32.totalorder %s90, %s91
    %p102 = scmp.eq.s32.totalorder %s14, 0
    %p103 = por %p101, %p102
    %p104 = scmp.ne.s32.totalorder %s90, %s91
    %p105 = scmp.eq.s32.totalorder %s15, 1
    %p106 = por %p104, %p105
    %p108 = scmp.ne.s32.totalorder %s91, %s107
    %p109 = scmp.eq.s32.totalorder %s15, 0
    %p110 = por %p108, %p109
    %p111 = scmp.le.s32.totalorder 1, %s9
    %p112 = scmp.lt.s32.totalorder %s9, 3
    %p113 = pnand %p111, %p112
    %p114 = pneg %p113
    // Predicated region
    $region9: #{conv3d_block.3} parent=5 // pred_check
      _
    $region10: #{conv3d_block.3} parent=5 // pred_check_branch
      %116 = sbr.rel (%p113) target = $region12
    $region11: #{conv3d_block.3} parent=5 // pred_region
      %s117 = ssub.s32 %s9, 1
      // Predicated region
      $region13: #{conv3d_block.3} parent=11 // pred_check
        %p118 = pneg %p56
      $region14: #{conv3d_block.3} parent=11 // pred_check_branch
        %120 = sbr.rel (%p118) target = $region16
      $region15: #{conv3d_block.3} parent=11 // pred_region
        _
      $region16: #{conv3d_block.3} parent=11 // pred_fallthru
        _
      // Predicated region
      $region17: #{conv3d_block.3} parent=11 // pred_check
        %p121 = pneg %p77
      $region18: #{conv3d_block.3} parent=11 // pred_check_branch
        %123 = sbr.rel (%p121) target = $region20
      $region19: #{conv3d_block.3} parent=11 // pred_region
        _
      $region20: #{conv3d_block.3} parent=11 // pred_fallthru
        _
    $region12: #{conv3d_block.3} parent=5 // pred_fallthru
      _
    %p124 = scmp.lt.s32.totalorder %s9, 2
    // Predicated region
    $region21: #{conv3d_block.3} parent=5 // pred_check
      %p125 = pneg %p124
    $region22: #{conv3d_block.3} parent=5 // pred_check_branch
      %127 = sbr.rel (%p125) target = $region24
    $region23: #{conv3d_block.3} parent=5 // pred_region
      // Predicated region
      $region25: #{conv3d_block.3} parent=23 // pred_check
        %p128 = pneg %p29
      $region26: #{conv3d_block.3} parent=23 // pred_check_branch
        %130 = sbr.rel (%p128) target = $region28
      $region27: #{conv3d_block.3} parent=23 // pred_region
        %p131 = scmp.lt.s32.totalorder %s9, 1
        %s132 = scalar_select %p131, %s9, 1
        %s133 = smul.addr %s132, 4
        %s134 = scalar_lea.vmem %s0, %s133
      $region28: #{conv3d_block.3} parent=23 // pred_fallthru
        _
    $region24: #{conv3d_block.3} parent=5 // pred_fallthru
      _
    %p135 = scmp.le.s32.totalorder 1, %s9
    %p136 = scmp.lt.s32.totalorder %s9, 3
    %p137 = pnand %p135, %p136
    %p138 = pneg %p137
    // Predicated region
    $region29: #{conv3d_block.3} parent=5 // pred_check
      _
    $region30: #{conv3d_block.3} parent=5 // pred_check_branch
      %140 = sbr.rel (%p137) target = $region32
    $region31: #{conv3d_block.3} parent=5 // pred_region
      %s141 = ssub.s32 %s9, 1
      %p142 = scmp.lt.s32.totalorder %s14, 1
      %s143 = scalar_select %p142, %s14, 1
      %s144 = smul.addr %s143, 4
      %s145 = scalar_lea.vmem %s0, %s144
      %p146 = pneg %p35
      %p147 = pneg %p32
      %p148 = pneg %p56
      %p149 = pneg %p53
      %p150 = pneg %p77
      %p151 = pneg %p74
      %p152 = pneg %p103
      %p153 = pneg %p100
      %p154 = scmp.lt.s32.totalorder %s14, 1
      %s155 = scalar_select %p154, %s14, 1
      %s156 = smul.addr %s155, 8
      %s157 = scalar_lea.vmem %s3, %s156
      %p158 = scmp.lt.s32.totalorder %s14, 1
      %s159 = scalar_select %p158, %s14, 1
      %s160 = smul.addr %s159, 4
      %s161 = scalar_lea.vmem %s0, %s160
      %p162 = scmp.lt.s32.totalorder %s14, 1
      %s163 = scalar_select %p162, %s14, 1
      %s164 = smul.addr %s163, 8
      %s165 = scalar_lea.vmem %s3, %s164
      %v166 = vld [vmem:[%s1] sm:$0xff]
      %v167 = vld [vmem:[%s161] sm:$0xf]
      %v168 = vunpack.c.l.bf16 %v167
      %170 = vset.pattern.permute.xlu0 0
      %171 = vperm.xlu0 %170, %v166
      %v172 = vpop.permute.xlu0 %171
      %v174 = vmul.f32 %v172, %v168
      %v175 = vld [vmem:[%s2] sm:$0xff]
      %177 = vset.pattern.permute.xlu0 0
      %178 = vperm.xlu0 %177, %v175
      %v179 = vpop.permute.xlu0 %178
      %v181 = vadd.f32 %v174, %v179
      %vm182 = vcmp.ge.f32.partialorder %v181, 0.0
      %v183 = vmul.f32 %v181, 0.2
      %v184 = vsel %vm182, %v181, %v183
      %185 = vst [vmem:[%s165] sm:$0xff] %v184
      %p186 = scmp.lt.s32.totalorder %s14, 1
      %s187 = scalar_select %p186, %s14, 1
      %s188 = smul.addr %s187, 8
      %s189 = scalar_lea.vmem %s3, %s188
      // Predicated region
      $region33: #{conv3d_block.3} parent=31 // pred_check
        %p190 = pneg %p100
      $region34: #{conv3d_block.3} parent=31 // pred_check_branch
        %192 = sbr.rel (%p190) target = $region36
      $region35: #{conv3d_block.3} parent=31 // pred_region
        _
      $region36: #{conv3d_block.3} parent=31 // pred_fallthru
        _
    $region32: #{conv3d_block.3} parent=5 // pred_fallthru
      _
    %p193 = scmp.le.s32.totalorder 2, %s9
    // Predicated region
    $region37: #{conv3d_block.3} parent=5 // pred_check
      %p194 = pneg %p193
    $region38: #{conv3d_block.3} parent=5 // pred_check_branch
      %196 = sbr.rel (%p194) target = $region40
    $region39: #{conv3d_block.3} parent=5 // pred_region
      %s197 = ssub.s32 %s9, 2
      // Predicated region
      $region41: #{conv3d_block.3} parent=39 // pred_check
        %p198 = pneg %p106
      $region42: #{conv3d_block.3} parent=39 // pred_check_branch
        %200 = sbr.rel (%p198) target = $region44
      $region43: #{conv3d_block.3} parent=39 // pred_region
        %p201 = scmp.lt.s32.totalorder %s15, 1
        %s202 = scalar_select %p201, %s15, 1
        %s203 = smul.addr %s202, 8
        %s204 = scalar_lea.vmem %s3, %s203
      $region44: #{conv3d_block.3} parent=39 // pred_fallthru
        _
    $region40: #{conv3d_block.3} parent=5 // pred_fallthru
      _
  $region6: #{conv3d_block.3} parent=0 // loop_footer
    %s13 = sadd.s32 1, %s9
  $region7: #{conv3d_block.3} parent=0 // loop_footer_branch
    %8 = sbr.rel target = $region3
  $region8: #{conv3d_block.3} parent=0 // loop_exit
    _

</llo_original>
